<compile_context>
chip_gen: v5e
topology: v5e:2x2
jax: 0.10.0
libtpu: 0.0.40
codegen_flags: <defaults>
</compile_context>

<pallas_src>
import jax
import jax.numpy as jnp
from jax.experimental import pallas as pl
from jax.experimental.pallas import tpu as pltpu

IN_DIM = 9
HIDDEN = 30
OUT_DIM = 1

# Max batch rows per grid step. In the feature-major layout the live
# activations are ~30 x TILE_B f32 (~240 KiB at 2048) plus double-buffered
# (9, TILE_B) input and (1, TILE_B) output tiles -- comfortably inside the
# default scoped-VMEM limit on v5e (16 MiB), v6e (32 MiB) and v7x (32 MiB).
TILE_B_MAX = 2048


def _mlp_kernel(x_ref,
                w1_ref, b1_ref, w2_ref, b2_ref, w3_ref, b3_ref,
                w4_ref, b4_ref, w5_ref, b5_ref,
                o_ref):
    # h has shape (features, TILE_B): batch occupies the lane axis.
    h = x_ref[...]                                                   # (9,  TB)
    h = jnp.tanh(jnp.dot(w1_ref[...], h,
                         preferred_element_type=jnp.float32) + b1_ref[...])
    h = jnp.tanh(jnp.dot(w2_ref[...], h,
                         preferred_element_type=jnp.float32) + b2_ref[...])
    h = jnp.tanh(jnp.dot(w3_ref[...], h,
                         preferred_element_type=jnp.float32) + b3_ref[...])
    h = jnp.tanh(jnp.dot(w4_ref[...], h,
                         preferred_element_type=jnp.float32) + b4_ref[...])
    o_ref[...] = (jnp.dot(w5_ref[...], h,
                          preferred_element_type=jnp.float32)
                  + b5_ref[...]).astype(o_ref.dtype)                 # (1,  TB)


def nn4_prior_forward(x, params):
    """x: (B, 9) float32. params: w{i} of shape (out, in), b{i} of shape (out, 1).
    Returns (B, 1) float32."""
    B = x.shape[0]
    # Lane-aligned tile, capped so VMEM stays small on every TPU generation.
    tile_b = min(TILE_B_MAX, max(128, pl.cdiv(B, 128) * 128))
    grid = pl.cdiv(B, tile_b)
    b_pad = grid * tile_b

    # Feature-major input; zero-pad the batch tail so the last block is full.
    x_t = jnp.transpose(x.astype(jnp.float32))                        # (9, B)
    if b_pad != B:
        x_t = jnp.pad(x_t, ((0, 0), (0, b_pad - B)))

    consts = [params["w1"], params["b1"],
              params["w2"], params["b2"],
              params["w3"], params["b3"],
              params["w4"], params["b4"],
              params["w5"], params["b5"]]

    def const_spec(a):
        # Full-array block, constant block index -> resident across grid steps.
        return pl.BlockSpec(a.shape, lambda i: (0, 0))

    out = pl.pallas_call(
        _mlp_kernel,
        out_shape=jax.ShapeDtypeStruct((OUT_DIM, b_pad), jnp.float32),
        grid_spec=pltpu.PrefetchScalarGridSpec(
            num_scalar_prefetch=0,
            grid=(grid,),
            in_specs=[pl.BlockSpec((IN_DIM, tile_b), lambda i: (0, i))]
                     + [const_spec(a) for a in consts],
            out_specs=pl.BlockSpec((OUT_DIM, tile_b), lambda i: (0, i)),
        ),
        compiler_params=pltpu.CompilerParams(
            dimension_semantics=("parallel",)),
    )(x_t, *consts)

    return jnp.transpose(out)[:B, :]                                  # (B, 1)


def init_params(key):
    """PyTorch-style Linear init: U(-1/sqrt(fan_in), 1/sqrt(fan_in)).
    Weights stored (out, in), biases (out, 1) -- the feature-major layout."""
    dims = [(IN_DIM, HIDDEN), (HIDDEN, HIDDEN), (HIDDEN, HIDDEN),
            (HIDDEN, HIDDEN), (HIDDEN, OUT_DIM)]
    params = {}
    keys = jax.random.split(key, 2 * len(dims))
    for i, (fan_in, fan_out) in enumerate(dims):
        bound = 1.0 / (fan_in ** 0.5)
        params[f"w{i + 1}"] = jax.random.uniform(
            keys[2 * i], (fan_out, fan_in), jnp.float32, -bound, bound)
        params[f"b{i + 1}"] = jax.random.uniform(
            keys[2 * i + 1], (fan_out, 1), jnp.float32, -bound, bound)
    return params


def _reference(x, p):
    h = jnp.tanh(x @ p["w1"].T + p["b1"].T)
    h = jnp.tanh(h @ p["w2"].T + p["b2"].T)
    h = jnp.tanh(h @ p["w3"].T + p["b3"].T)
    h = jnp.tanh(h @ p["w4"].T + p["b4"].T)
    return h @ p["w5"].T + p["b5"].T


if __name__ == "__main__":
    key = jax.random.PRNGKey(0)
    k_x, k_p = jax.random.split(key)
    params = init_params(k_p)

    # Small check (single grid step, padded 8 -> 128 rows).
    B = 8
    x = jax.random.normal(k_x, (B, IN_DIM), jnp.float32)
    out = jax.block_until_ready(nn4_prior_forward(x, params))
    ref = _reference(x, params)
    assert out.shape == (B, OUT_DIM)
    assert jnp.allclose(out, ref, atol=1e-5, rtol=1e-5), "mismatch vs reference"

    # Larger check exercising grid > 1 and the padded tail block.
    B2 = 2500
    x2 = jax.random.normal(k_x, (B2, IN_DIM), jnp.float32)
    out2 = jax.block_until_ready(nn4_prior_forward(x2, params))
    ref2 = _reference(x2, params)
    assert out2.shape == (B2, OUT_DIM)
    assert jnp.allclose(out2, ref2, atol=1e-5, rtol=1e-5), "mismatch vs reference (tiled)"

    print("KERNEL_OK")
</pallas_src>

<mosaic_0001>
module attributes {stable_mosaic.version = 11 : i64} {
  func.func @_mlp_kernel(%arg0: i32, %arg1: memref<9x128xf32, #tpu.memory_space<vmem>>, %arg2: memref<30x9xf32, #tpu.memory_space<vmem>>, %arg3: memref<30x1xf32, #tpu.memory_space<vmem>>, %arg4: memref<30x30xf32, #tpu.memory_space<vmem>>, %arg5: memref<30x1xf32, #tpu.memory_space<vmem>>, %arg6: memref<30x30xf32, #tpu.memory_space<vmem>>, %arg7: memref<30x1xf32, #tpu.memory_space<vmem>>, %arg8: memref<30x30xf32, #tpu.memory_space<vmem>>, %arg9: memref<30x1xf32, #tpu.memory_space<vmem>>, %arg10: memref<1x30xf32, #tpu.memory_space<vmem>>, %arg11: memref<1x1xf32, #tpu.memory_space<vmem>>, %arg12: memref<1x128xf32, #tpu.memory_space<vmem>>) attributes {dimension_semantics = [#tpu.dimension_semantics<parallel>], iteration_bounds = array<i64: 1>, scalar_prefetch = 0 : i64, scratch_operands = 0 : i64, tpu.core_type = #tpu.core_type<tc>, window_params = [{transform_indices = @transform_0, window_bounds = array<i64: 9, 128>}, {pipeline_mode = #tpu.pipeline_mode<synchronous>, transform_indices = @transform_1, window_bounds = array<i64: 30, 9>}, {pipeline_mode = #tpu.pipeline_mode<synchronous>, transform_indices = @transform_2, window_bounds = array<i64: 30, 1>}, {pipeline_mode = #tpu.pipeline_mode<synchronous>, transform_indices = @transform_3, window_bounds = array<i64: 30, 30>}, {pipeline_mode = #tpu.pipeline_mode<synchronous>, transform_indices = @transform_4, window_bounds = array<i64: 30, 1>}, {pipeline_mode = #tpu.pipeline_mode<synchronous>, transform_indices = @transform_5, window_bounds = array<i64: 30, 30>}, {pipeline_mode = #tpu.pipeline_mode<synchronous>, transform_indices = @transform_6, window_bounds = array<i64: 30, 1>}, {pipeline_mode = #tpu.pipeline_mode<synchronous>, transform_indices = @transform_7, window_bounds = array<i64: 30, 30>}, {pipeline_mode = #tpu.pipeline_mode<synchronous>, transform_indices = @transform_8, window_bounds = array<i64: 30, 1>}, {pipeline_mode = #tpu.pipeline_mode<synchronous>, transform_indices = @transform_9, window_bounds = array<i64: 1, 30>}, {pipeline_mode = #tpu.pipeline_mode<synchronous>, transform_indices = @transform_10, window_bounds = array<i64: 1, 1>}, {transform_indices = @transform_11, window_bounds = array<i64: 1, 128>}]} {
    %c0 = arith.constant 0 : index
    %c0_0 = arith.constant 0 : index
    %0 = vector.load %arg1[%c0, %c0_0] : memref<9x128xf32, #tpu.memory_space<vmem>>, vector<9x128xf32>
    %c0_1 = arith.constant 0 : index
    %c0_2 = arith.constant 0 : index
    %1 = vector.load %arg2[%c0_1, %c0_2] : memref<30x9xf32, #tpu.memory_space<vmem>>, vector<30x9xf32>
    %cst = arith.constant dense<0.000000e+00> : vector<30x128xf32>
    %2 = tpu.matmul %1, %0, %cst {dimension_numbers = #tpu.dot_dimension_numbers<[1], [0], [0], [1], [0, 0, 1, 1], [], []>} : vector<30x9xf32>, vector<9x128xf32>, vector<30x128xf32> -> vector<30x128xf32>
    %c0_3 = arith.constant 0 : index
    %c0_4 = arith.constant 0 : index
    %3 = vector.load %arg3[%c0_3, %c0_4] : memref<30x1xf32, #tpu.memory_space<vmem>>, vector<30x1xf32>
    %4 = vector.broadcast %3 : vector<30x1xf32> to vector<30x128xf32>
    %5 = arith.addf %2, %4 : vector<30x128xf32>
    %6 = math.tanh %5 : vector<30x128xf32>
    %c0_5 = arith.constant 0 : index
    %c0_6 = arith.constant 0 : index
    %7 = vector.load %arg4[%c0_5, %c0_6] : memref<30x30xf32, #tpu.memory_space<vmem>>, vector<30x30xf32>
    %cst_7 = arith.constant dense<0.000000e+00> : vector<30x128xf32>
    %8 = tpu.matmul %7, %6, %cst_7 {dimension_numbers = #tpu.dot_dimension_numbers<[1], [0], [0], [1], [0, 0, 1, 1], [], []>} : vector<30x30xf32>, vector<30x128xf32>, vector<30x128xf32> -> vector<30x128xf32>
    %c0_8 = arith.constant 0 : index
    %c0_9 = arith.constant 0 : index
    %9 = vector.load %arg5[%c0_8, %c0_9] : memref<30x1xf32, #tpu.memory_space<vmem>>, vector<30x1xf32>
    %10 = vector.broadcast %9 : vector<30x1xf32> to vector<30x128xf32>
    %11 = arith.addf %8, %10 : vector<30x128xf32>
    %12 = math.tanh %11 : vector<30x128xf32>
    %c0_10 = arith.constant 0 : index
    %c0_11 = arith.constant 0 : index
    %13 = vector.load %arg6[%c0_10, %c0_11] : memref<30x30xf32, #tpu.memory_space<vmem>>, vector<30x30xf32>
    %cst_12 = arith.constant dense<0.000000e+00> : vector<30x128xf32>
    %14 = tpu.matmul %13, %12, %cst_12 {dimension_numbers = #tpu.dot_dimension_numbers<[1], [0], [0], [1], [0, 0, 1, 1], [], []>} : vector<30x30xf32>, vector<30x128xf32>, vector<30x128xf32> -> vector<30x128xf32>
    %c0_13 = arith.constant 0 : index
    %c0_14 = arith.constant 0 : index
    %15 = vector.load %arg7[%c0_13, %c0_14] : memref<30x1xf32, #tpu.memory_space<vmem>>, vector<30x1xf32>
    %16 = vector.broadcast %15 : vector<30x1xf32> to vector<30x128xf32>
    %17 = arith.addf %14, %16 : vector<30x128xf32>
    %18 = math.tanh %17 : vector<30x128xf32>
    %c0_15 = arith.constant 0 : index
    %c0_16 = arith.constant 0 : index
    %19 = vector.load %arg8[%c0_15, %c0_16] : memref<30x30xf32, #tpu.memory_space<vmem>>, vector<30x30xf32>
    %cst_17 = arith.constant dense<0.000000e+00> : vector<30x128xf32>
    %20 = tpu.matmul %19, %18, %cst_17 {dimension_numbers = #tpu.dot_dimension_numbers<[1], [0], [0], [1], [0, 0, 1, 1], [], []>} : vector<30x30xf32>, vector<30x128xf32>, vector<30x128xf32> -> vector<30x128xf32>
    %c0_18 = arith.constant 0 : index
    %c0_19 = arith.constant 0 : index
    %21 = vector.load %arg9[%c0_18, %c0_19] : memref<30x1xf32, #tpu.memory_space<vmem>>, vector<30x1xf32>
    %22 = vector.broadcast %21 : vector<30x1xf32> to vector<30x128xf32>
    %23 = arith.addf %20, %22 : vector<30x128xf32>
    %24 = math.tanh %23 : vector<30x128xf32>
    %c0_20 = arith.constant 0 : index
    %c0_21 = arith.constant 0 : index
    %25 = vector.load %arg10[%c0_20, %c0_21] : memref<1x30xf32, #tpu.memory_space<vmem>>, vector<1x30xf32>
    %cst_22 = arith.constant dense<0.000000e+00> : vector<1x128xf32>
    %26 = tpu.matmul %25, %24, %cst_22 {dimension_numbers = #tpu.dot_dimension_numbers<[1], [0], [0], [1], [0, 0, 1, 1], [], []>} : vector<1x30xf32>, vector<30x128xf32>, vector<1x128xf32> -> vector<1x128xf32>
    %c0_23 = arith.constant 0 : index
    %c0_24 = arith.constant 0 : index
    %27 = vector.load %arg11[%c0_23, %c0_24] : memref<1x1xf32, #tpu.memory_space<vmem>>, vector<1x1xf32>
    %28 = vector.broadcast %27 : vector<1x1xf32> to vector<1x128xf32>
    %29 = arith.addf %26, %28 : vector<1x128xf32>
    %c0_25 = arith.constant 0 : index
    %c0_26 = arith.constant 0 : index
    %30 = vector.load %arg12[%c0_25, %c0_26] : memref<1x128xf32, #tpu.memory_space<vmem>>, vector<1x128xf32>
    tpu.vector_store %arg12[%c0_25, %c0_26], %29 {strides = array<i32>} : memref<1x128xf32, #tpu.memory_space<vmem>>, vector<1x128xf32>,
    return
  }
  func.func @transform_0(%arg0: i32) -> (i32, i32) {
    %c0_i32 = arith.constant 0 : i32
    %c0_i32_0 = arith.constant 0 : i32
    return %c0_i32, %arg0 : i32, i32
  }
  func.func @transform_1(%arg0: i32) -> (i32, i32) {
    %c0_i32 = arith.constant 0 : i32
    %c0_i32_0 = arith.constant 0 : i32
    %c0_i32_1 = arith.constant 0 : i32
    return %c0_i32, %c0_i32_0 : i32, i32
  }
  func.func @transform_2(%arg0: i32) -> (i32, i32) {
    %c0_i32 = arith.constant 0 : i32
    %c0_i32_0 = arith.constant 0 : i32
    %c0_i32_1 = arith.constant 0 : i32
    return %c0_i32, %c0_i32_0 : i32, i32
  }
  func.func @transform_3(%arg0: i32) -> (i32, i32) {
    %c0_i32 = arith.constant 0 : i32
    %c0_i32_0 = arith.constant 0 : i32
    %c0_i32_1 = arith.constant 0 : i32
    return %c0_i32, %c0_i32_0 : i32, i32
  }
  func.func @transform_4(%arg0: i32) -> (i32, i32) {
    %c0_i32 = arith.constant 0 : i32
    %c0_i32_0 = arith.constant 0 : i32
    %c0_i32_1 = arith.constant 0 : i32
    return %c0_i32, %c0_i32_0 : i32, i32
  }
  func.func @transform_5(%arg0: i32) -> (i32, i32) {
    %c0_i32 = arith.constant 0 : i32
    %c0_i32_0 = arith.constant 0 : i32
    %c0_i32_1 = arith.constant 0 : i32
    return %c0_i32, %c0_i32_0 : i32, i32
  }
  func.func @transform_6(%arg0: i32) -> (i32, i32) {
    %c0_i32 = arith.constant 0 : i32
    %c0_i32_0 = arith.constant 0 : i32
    %c0_i32_1 = arith.constant 0 : i32
    return %c0_i32, %c0_i32_0 : i32, i32
  }
  func.func @transform_7(%arg0: i32) -> (i32, i32) {
    %c0_i32 = arith.constant 0 : i32
    %c0_i32_0 = arith.constant 0 : i32
    %c0_i32_1 = arith.constant 0 : i32
    return %c0_i32, %c0_i32_0 : i32, i32
  }
  func.func @transform_8(%arg0: i32) -> (i32, i32) {
    %c0_i32 = arith.constant 0 : i32
    %c0_i32_0 = arith.constant 0 : i32
    %c0_i32_1 = arith.constant 0 : i32
    return %c0_i32, %c0_i32_0 : i32, i32
  }
  func.func @transform_9(%arg0: i32) -> (i32, i32) {
    %c0_i32 = arith.constant 0 : i32
    %c0_i32_0 = arith.constant 0 : i32
    %c0_i32_1 = arith.constant 0 : i32
    return %c0_i32, %c0_i32_0 : i32, i32
  }
  func.func @transform_10(%arg0: i32) -> (i32, i32) {
    %c0_i32 = arith.constant 0 : i32
    %c0_i32_0 = arith.constant 0 : i32
    %c0_i32_1 = arith.constant 0 : i32
    return %c0_i32, %c0_i32_0 : i32, i32
  }
  func.func @transform_11(%arg0: i32) -> (i32, i32) {
    %c0_i32 = arith.constant 0 : i32
    %c0_i32_0 = arith.constant 0 : i32
    return %c0_i32, %arg0 : i32, i32
  }
}

</mosaic_0001>

<llo_original>
// kernel: tpu_custom_call.1
$region0: #{tpu_custom_call.1}
  #allocation0 [shape = 'u32[]', space=smem, size = 0x4, offset = 0x4, fixed_abs, tag = 'smem constant byte address 0x4 - core index']
  #allocation1 [shape = 'u32[72,128]{1,0:T(1,128)}', space=vmem, size = 0x9000, scoped, tag = 'internal scratch']
  #allocation2 [shape = 'f32[1,1]{1,0:T(1,128)S(1)}', space=vmem, size = 0x200, scoped, tag = 'scoped memory for tpu_custom_call.1']
  %s0 = inlined_call_operand.vmem [shape: f32[9,128], index: 0, kind: input, shape index: {}]
  %s1 = inlined_call_operand.vmem [shape: f32[30,9], index: 1, kind: input, shape index: {}]
  %s2 = inlined_call_operand.vmem [shape: f32[30,1], index: 2, kind: input, shape index: {}]
  %s3 = inlined_call_operand.vmem [shape: f32[30,30], index: 3, kind: input, shape index: {}]
  %s4 = inlined_call_operand.vmem [shape: f32[30,1], index: 4, kind: input, shape index: {}]
  %s5 = inlined_call_operand.vmem [shape: f32[30,30], index: 5, kind: input, shape index: {}]
  %s6 = inlined_call_operand.vmem [shape: f32[30,1], index: 6, kind: input, shape index: {}]
  %s7 = inlined_call_operand.vmem [shape: f32[30,30], index: 7, kind: input, shape index: {}]
  %s8 = inlined_call_operand.vmem [shape: f32[30,1], index: 8, kind: input, shape index: {}]
  %s9 = inlined_call_operand.vmem [shape: f32[1,30], index: 9, kind: input, shape index: {}]
  %s10 = inlined_call_operand.<no memory space> [shape: f32[1,1], index: 10, kind: input, shape index: {}]
  %s11 = inlined_call_operand.hbm [shape: f32[1,128], index: 11, kind: output, shape index: {}]
  %s12 = sld [smem:[#allocation0]]
  $region54: #{tpu_custom_call.1} parent=0
    _
  %s14 = ssub.s32 1, %s12
  %s15 = scalar_select 0, %s14, %s12
  %v16 = vstv %s10
  %17 = vst [vmem:[#allocation2] sm:$0x1] %v16
  $region1: #{tpu_custom_call.1} parent=0
    #allocation3 [shape = 'u8[512]{0}', space=vmem, size = 0x400, scoped, tag = 'output window, operand 0, single buffered']
    #allocation4 [shape = 's32[1]{0}', space=sflag, size = 0x4, scoped, tag = 'scoped memory for tpu_custom_call.1']
    %18 = vsyncpa [#allocation4], 0
    // Predicated region
    $region2: #{tpu_custom_call.1} parent=1 // pred_check
      _
    $region3: #{tpu_custom_call.1} parent=1 // pred_check_branch
      %20 = sbr.rel (0) target = $region5
    $region4: #{tpu_custom_call.1} parent=1 // pred_region
      _
    $region5: #{tpu_custom_call.1} parent=1 // pred_fallthru
      _
    // Predicated region
    $region6: #{tpu_custom_call.1} parent=1 // pred_check
      _
    $region7: #{tpu_custom_call.1} parent=1 // pred_check_branch
      %22 = sbr.rel (0) target = $region9
    $region8: #{tpu_custom_call.1} parent=1 // pred_region
      _
    $region9: #{tpu_custom_call.1} parent=1 // pred_fallthru
      _
    // Predicated region
    $region10: #{tpu_custom_call.1} parent=1 // pred_check
      _
    $region11: #{tpu_custom_call.1} parent=1 // pred_check_branch
      %24 = sbr.rel (0) target = $region13
    $region12: #{tpu_custom_call.1} parent=1 // pred_region
      _
    $region13: #{tpu_custom_call.1} parent=1 // pred_fallthru
      _
    // Predicated region
    $region14: #{tpu_custom_call.1} parent=1 // pred_check
      _
    $region15: #{tpu_custom_call.1} parent=1 // pred_check_branch
      %26 = sbr.rel (0) target = $region17
    $region16: #{tpu_custom_call.1} parent=1 // pred_region
      _
    $region17: #{tpu_custom_call.1} parent=1 // pred_fallthru
      _
    // Predicated region
    $region18: #{tpu_custom_call.1} parent=1 // pred_check
      _
    $region19: #{tpu_custom_call.1} parent=1 // pred_check_branch
      %28 = sbr.rel (0) target = $region21
    $region20: #{tpu_custom_call.1} parent=1 // pred_region
      _
    $region21: #{tpu_custom_call.1} parent=1 // pred_fallthru
      _
    // Predicated region
    $region22: #{tpu_custom_call.1} parent=1 // pred_check
      _
    $region23: #{tpu_custom_call.1} parent=1 // pred_check_branch
      %30 = sbr.rel (0) target = $region25
    $region24: #{tpu_custom_call.1} parent=1 // pred_region
      _
    $region25: #{tpu_custom_call.1} parent=1 // pred_fallthru
      _
    // Predicated region
    $region26: #{tpu_custom_call.1} parent=1 // pred_check
      _
    $region27: #{tpu_custom_call.1} parent=1 // pred_check_branch
      %32 = sbr.rel (0) target = $region29
    $region28: #{tpu_custom_call.1} parent=1 // pred_region
      _
    $region29: #{tpu_custom_call.1} parent=1 // pred_fallthru
      _
    // Predicated region
    $region30: #{tpu_custom_call.1} parent=1 // pred_check
      _
    $region31: #{tpu_custom_call.1} parent=1 // pred_check_branch
      %34 = sbr.rel (0) target = $region33
    $region32: #{tpu_custom_call.1} parent=1 // pred_region
      _
    $region33: #{tpu_custom_call.1} parent=1 // pred_fallthru
      _
    // Predicated region
    $region34: #{tpu_custom_call.1} parent=1 // pred_check
      _
    $region35: #{tpu_custom_call.1} parent=1 // pred_check_branch
      %36 = sbr.rel (0) target = $region37
    $region36: #{tpu_custom_call.1} parent=1 // pred_region
      _
    $region37: #{tpu_custom_call.1} parent=1 // pred_fallthru
      _
    // Predicated region
    $region38: #{tpu_custom_call.1} parent=1 // pred_check
      _
    $region39: #{tpu_custom_call.1} parent=1 // pred_check_branch
      %38 = sbr.rel (0) target = $region41
    $region40: #{tpu_custom_call.1} parent=1 // pred_region
      _
    $region41: #{tpu_custom_call.1} parent=1 // pred_fallthru
      _
    // Predicated region
    $region42: #{tpu_custom_call.1} parent=1 // pred_check
      _
    $region43: #{tpu_custom_call.1} parent=1 // pred_check_branch
      %40 = sbr.rel (0) target = $region45
    $region44: #{tpu_custom_call.1} parent=1 // pred_region
      _
    $region45: #{tpu_custom_call.1} parent=1 // pred_fallthru
      _
    %v41 = vld [vmem:[%s0] sm:$0xff]
    %v42 = vld [vmem:[%s0 + $0x8] sm:$0x1]
    %v43 = vld [vmem:[%s1] sm:$0xff]
    %v44 = vld [vmem:[%s1 + $0x8] sm:$0xff]
    %v45 = vld [vmem:[%s1 + $0x10] sm:$0xff]
    %v46 = vld [vmem:[%s1 + $0x18] sm:$0x3f]
    %v47 = vld [vmem:[%s2] sm:$0xff]
    %v48 = vld [vmem:[%s2 + $0x8] sm:$0xff]
    %v49 = vld [vmem:[%s2 + $0x10] sm:$0xff]
    %v50 = vld [vmem:[%s2 + $0x18] sm:$0x3f]
    %52 = vset.pattern.permute.xlu0 0
    %53 = vperm.xlu0 %52, %v47
    %v54 = vpop.permute.xlu0 %53
    %57 = vset.pattern.permute.xlu0 0
    %58 = vperm.xlu0 %57, %v48
    %v59 = vpop.permute.xlu0 %58
    %62 = vset.pattern.permute.xlu0 0
    %63 = vperm.xlu0 %62, %v49
    %v64 = vpop.permute.xlu0 %63
    %67 = vset.pattern.permute.xlu0 0
    %68 = vperm.xlu0 %67, %v50
    %v69 = vpop.permute.xlu0 %68
    %vm71 = vcmask 72704
    %v73 = vsel %vm71, %v43, 0
    %v76 = vsel %vm71, %v44, 0
    %v79 = vsel %vm71, %v45, 0
    %v82 = vsel %vm71, %v46, 0
    %vm84 = vcmask 1040384
    %v86 = vsel %vm84, %v42, 0
    %88 = vmatpush.msra.mxu0 0.0
    %89 = vmatpush.msra.mxu0 0.0
    %90 = vmatpush.msra.mxu0 0.0
    %91 = vmatpush.msra.mxu0 0.0
    %92 = vmatpush.msra.mxu0 0.0
    %93 = vmatpush.msra.mxu0 0.0
    %94 = vmatpush.msra.mxu0 0.0
    %95 = vmatpush.msra.mxu0 0.0
    %96 = vmatpush.msra.mxu0 0.0
    %97 = vmatpush.msra.mxu0 0.0
    %98 = vmatpush.msra.mxu0 0.0
    %99 = vmatpush.msra.mxu0 0.0
    %100 = vmatpush.msra.mxu0 0.0
    %101 = vmatpush.msra.mxu0 0.0
    %102 = vmatpush.msra.mxu0 %v86
    %103 = vmatpush.msra.mxu0 %v41
    %104 = vmatmul.f32.gmra.mxu0 %v73
    %v105 = vpop.f32.mrf.mxu0
    %v106 = vadd.f32 %v54, %v105
    %107 = vmatmul.f32.gmra.mxu0 %v76
    %v108 = vpop.f32.mrf.mxu0
    %v109 = vadd.f32 %v59, %v108
    %110 = vmatmul.f32.gmra.mxu0 %v79
    %v111 = vpop.f32.mrf.mxu0
    %v112 = vadd.f32 %v64, %v111
    %113 = vmatmul.f32.gmra.mxu0 %v82
    %v114 = vpop.f32.mrf.mxu0
    %v115 = vadd.f32 %v69, %v114
    %116 = vdwg.mxu0
    %v117 = vtanh.pop %v106
    %v118 = vtanh.pop %v109
    %v119 = vtanh.pop %v112
    %v120 = vtanh.pop %v115
    %v121 = vld [vmem:[%s3] sm:$0xff]
    %v122 = vld [vmem:[%s3 + $0x8] sm:$0xff]
    %v123 = vld [vmem:[%s3 + $0x10] sm:$0xff]
    %v124 = vld [vmem:[%s3 + $0x18] sm:$0x3f]
    %v125 = vld [vmem:[%s4] sm:$0xff]
    %v126 = vld [vmem:[%s4 + $0x8] sm:$0xff]
    %v127 = vld [vmem:[%s4 + $0x10] sm:$0xff]
    %v128 = vld [vmem:[%s4 + $0x18] sm:$0x3f]
    %130 = vset.pattern.permute.xlu0 0
    %131 = vperm.xlu0 %130, %v125
    %v132 = vpop.permute.xlu0 %131
    %135 = vset.pattern.permute.xlu0 0
    %136 = vperm.xlu0 %135, %v126
    %v137 = vpop.permute.xlu0 %136
    %140 = vset.pattern.permute.xlu0 0
    %141 = vperm.xlu0 %140, %v127
    %v142 = vpop.permute.xlu0 %141
    %145 = vset.pattern.permute.xlu0 0
    %146 = vperm.xlu0 %145, %v128
    %v147 = vpop.permute.xlu0 %146
    %vm149 = vcmask 244736
    %v151 = vsel %vm149, %v121, 0
    %v154 = vsel %vm149, %v122, 0
    %v157 = vsel %vm149, %v123, 0
    %v160 = vsel %vm149, %v124, 0
    %vm162 = vcmask 1045504
    %v164 = vsel %vm162, %v120, 0
    %166 = vmatpush.msra.mxu0 0.0
    %167 = vmatpush.msra.mxu0 0.0
    %168 = vmatpush.msra.mxu0 0.0
    %169 = vmatpush.msra.mxu0 0.0
    %170 = vmatpush.msra.mxu0 0.0
    %171 = vmatpush.msra.mxu0 0.0
    %172 = vmatpush.msra.mxu0 0.0
    %173 = vmatpush.msra.mxu0 0.0
    %174 = vmatpush.msra.mxu0 0.0
    %175 = vmatpush.msra.mxu0 0.0
    %176 = vmatpush.msra.mxu0 0.0
    %177 = vmatpush.msra.mxu0 0.0
    %178 = vmatpush.msra.mxu0 %v164
    %179 = vmatpush.msra.mxu0 %v119
    %180 = vmatpush.msra.mxu0 %v118
    %181 = vmatpush.msra.mxu0 %v117
    %182 = vmatmul.f32.gmra.mxu0 %v151
    %v183 = vpop.f32.mrf.mxu0
    %v184 = vadd.f32 %v132, %v183
    %185 = vmatmul.f32.gmra.mxu0 %v154
    %v186 = vpop.f32.mrf.mxu0
    %v187 = vadd.f32 %v137, %v186
    %188 = vmatmul.f32.gmra.mxu0 %v157
    %v189 = vpop.f32.mrf.mxu0
    %v190 = vadd.f32 %v142, %v189
    %191 = vmatmul.f32.gmra.mxu0 %v160
    %v192 = vpop.f32.mrf.mxu0
    %v193 = vadd.f32 %v147, %v192
    %194 = vdwg.mxu0
    %v195 = vtanh.pop %v184
    %v196 = vtanh.pop %v187
    %v197 = vtanh.pop %v190
    %v198 = vtanh.pop %v193
    %v199 = vld [vmem:[%s5] sm:$0xff]
    %v200 = vld [vmem:[%s5 + $0x8] sm:$0xff]
    %v201 = vld [vmem:[%s5 + $0x10] sm:$0xff]
    %v202 = vld [vmem:[%s5 + $0x18] sm:$0x3f]
    %v203 = vld [vmem:[%s6] sm:$0xff]
    %v204 = vld [vmem:[%s6 + $0x8] sm:$0xff]
    %v205 = vld [vmem:[%s6 + $0x10] sm:$0xff]
    %v206 = vld [vmem:[%s6 + $0x18] sm:$0x3f]
    %208 = vset.pattern.permute.xlu0 0
    %209 = vperm.xlu0 %208, %v203
    %v210 = vpop.permute.xlu0 %209
    %213 = vset.pattern.permute.xlu0 0
    %214 = vperm.xlu0 %213, %v204
    %v215 = vpop.permute.xlu0 %214
    %218 = vset.pattern.permute.xlu0 0
    %219 = vperm.xlu0 %218, %v205
    %v220 = vpop.permute.xlu0 %219
    %223 = vset.pattern.permute.xlu0 0
    %224 = vperm.xlu0 %223, %v206
    %v225 = vpop.permute.xlu0 %224
    %v228 = vsel %vm149, %v199, 0
    %v231 = vsel %vm149, %v200, 0
    %v234 = vsel %vm149, %v201, 0
    %v237 = vsel %vm149, %v202, 0
    %v240 = vsel %vm162, %v198, 0
    %242 = vmatpush.msra.mxu0 0.0
    %243 = vmatpush.msra.mxu0 0.0
    %244 = vmatpush.msra.mxu0 0.0
    %245 = vmatpush.msra.mxu0 0.0
    %246 = vmatpush.msra.mxu0 0.0
    %247 = vmatpush.msra.mxu0 0.0
    %248 = vmatpush.msra.mxu0 0.0
    %249 = vmatpush.msra.mxu0 0.0
    %250 = vmatpush.msra.mxu0 0.0
    %251 = vmatpush.msra.mxu0 0.0
    %252 = vmatpush.msra.mxu0 0.0
    %253 = vmatpush.msra.mxu0 0.0
    %254 = vmatpush.msra.mxu0 %v240
    %255 = vmatpush.msra.mxu0 %v197
    %256 = vmatpush.msra.mxu0 %v196
    %257 = vmatpush.msra.mxu0 %v195
    %258 = vmatmul.f32.gmra.mxu0 %v228
    %v259 = vpop.f32.mrf.mxu0
    %v260 = vadd.f32 %v210, %v259
    %261 = vmatmul.f32.gmra.mxu0 %v231
    %v262 = vpop.f32.mrf.mxu0
    %v263 = vadd.f32 %v215, %v262
    %264 = vmatmul.f32.gmra.mxu0 %v234
    %v265 = vpop.f32.mrf.mxu0
    %v266 = vadd.f32 %v220, %v265
    %267 = vmatmul.f32.gmra.mxu0 %v237
    %v268 = vpop.f32.mrf.mxu0
    %v269 = vadd.f32 %v225, %v268
    %270 = vdwg.mxu0
    %v271 = vtanh.pop %v260
    %v272 = vtanh.pop %v263
    %v273 = vtanh.pop %v266
    %v274 = vtanh.pop %v269
    %v275 = vld [vmem:[%s7] sm:$0xff]
    %v276 = vld [vmem:[%s7 + $0x8] sm:$0xff]
    %v277 = vld [vmem:[%s7 + $0x10] sm:$0xff]
    %v278 = vld [vmem:[%s7 + $0x18] sm:$0x3f]
    %v279 = vld [vmem:[%s8] sm:$0xff]
    %v280 = vld [vmem:[%s8 + $0x8] sm:$0xff]
    %v281 = vld [vmem:[%s8 + $0x10] sm:$0xff]
    %v282 = vld [vmem:[%s8 + $0x18] sm:$0x3f]
    %284 = vset.pattern.permute.xlu0 0
    %285 = vperm.xlu0 %284, %v279
    %v286 = vpop.permute.xlu0 %285
    %289 = vset.pattern.permute.xlu0 0
    %290 = vperm.xlu0 %289, %v280
    %v291 = vpop.permute.xlu0 %290
    %294 = vset.pattern.permute.xlu0 0
    %295 = vperm.xlu0 %294, %v281
    %v296 = vpop.permute.xlu0 %295
    %299 = vset.pattern.permute.xlu0 0
    %300 = vperm.xlu0 %299, %v282
    %v301 = vpop.permute.xlu0 %300
    %v304 = vsel %vm149, %v275, 0
    %v307 = vsel %vm149, %v276, 0
    %v310 = vsel %vm149, %v277, 0
    %v313 = vsel %vm149, %v278, 0
    %v316 = vsel %vm162, %v274, 0
    %318 = vmatpush.msra.mxu0 0.0
    %319 = vmatpush.msra.mxu0 0.0
    %320 = vmatpush.msra.mxu0 0.0
    %321 = vmatpush.msra.mxu0 0.0
    %322 = vmatpush.msra.mxu0 0.0
    %323 = vmatpush.msra.mxu0 0.0
    %324 = vmatpush.msra.mxu0 0.0
    %325 = vmatpush.msra.mxu0 0.0
    %326 = vmatpush.msra.mxu0 0.0
    %327 = vmatpush.msra.mxu0 0.0
    %328 = vmatpush.msra.mxu0 0.0
    %329 = vmatpush.msra.mxu0 0.0
    %330 = vmatpush.msra.mxu0 %v316
    %331 = vmatpush.msra.mxu0 %v273
    %332 = vmatpush.msra.mxu0 %v272
    %333 = vmatpush.msra.mxu0 %v271
    %334 = vmatmul.f32.gmra.mxu0 %v304
    %v335 = vpop.f32.mrf.mxu0
    %v336 = vadd.f32 %v286, %v335
    %337 = vmatmul.f32.gmra.mxu0 %v307
    %v338 = vpop.f32.mrf.mxu0
    %v339 = vadd.f32 %v291, %v338
    %340 = vmatmul.f32.gmra.mxu0 %v310
    %v341 = vpop.f32.mrf.mxu0
    %v342 = vadd.f32 %v296, %v341
    %343 = vmatmul.f32.gmra.mxu0 %v313
    %v344 = vpop.f32.mrf.mxu0
    %v345 = vadd.f32 %v301, %v344
    %346 = vdwg.mxu0
    %v347 = vtanh.pop %v336
    %v348 = vtanh.pop %v339
    %v349 = vtanh.pop %v342
    %v350 = vtanh.pop %v345
    %v351 = vld [vmem:[%s9] sm:$0x1]
    %v352 = vld [vmem:[#allocation2] sm:$0x1]
    %354 = vset.pattern.permute.xlu0 0
    %355 = vperm.xlu0 %354, %v352
    %v356 = vpop.permute.xlu0 %355
    %v358 = vperm.slane %v356, 0
    %v360 = vsel %vm149, %v351, 0
    %v363 = vsel %vm162, %v350, 0
    %365 = vmatpush.msra.mxu0 0.0
    %366 = vmatpush.msra.mxu0 0.0
    %367 = vmatpush.msra.mxu0 0.0
    %368 = vmatpush.msra.mxu0 0.0
    %369 = vmatpush.msra.mxu0 0.0
    %370 = vmatpush.msra.mxu0 0.0
    %371 = vmatpush.msra.mxu0 0.0
    %372 = vmatpush.msra.mxu0 0.0
    %373 = vmatpush.msra.mxu0 0.0
    %374 = vmatpush.msra.mxu0 0.0
    %375 = vmatpush.msra.mxu0 0.0
    %376 = vmatpush.msra.mxu0 0.0
    %377 = vmatpush.msra.mxu0 %v363
    %378 = vmatpush.msra.mxu0 %v349
    %379 = vmatpush.msra.mxu0 %v348
    %380 = vmatpush.msra.mxu0 %v347
    %381 = vmatmul.f32.gmra.mxu0 %v360
    %v382 = vpop.f32.mrf.mxu0
    %v383 = vadd.f32 %v358, %v382
    %384 = vdwg.mxu0
    %385 = vst [vmem:[#allocation3] sm:$0x1] %v383
    // Predicated region
    $region46: #{tpu_custom_call.1} parent=1 // pred_check
      _
    $region47: #{tpu_custom_call.1} parent=1 // pred_check_branch
      %387 = sbr.rel (0) target = $region49
    $region48: #{tpu_custom_call.1} parent=1 // pred_region
      %389 = vsyncadd [#allocation4], 0
      %s391 = sshll.u32 [#allocation3], 4
      %s392 = int_to_ptr.vmem [resolvable:$true] %s391
      %s393 = sshll.u32 %s11, 4
      %s394 = int_to_ptr.hbm [resolvable:$true] %s393
      %396 = dma.vmem_to_hbm [thread:$0]  %s392, 16, %s394, [#allocation4]
    $region49: #{tpu_custom_call.1} parent=1 // pred_fallthru
      _
    // Predicated region
    $region50: #{tpu_custom_call.1} parent=1 // pred_check
      _
    $region51: #{tpu_custom_call.1} parent=1 // pred_check_branch
      %398 = sbr.rel (0) target = $region53
    $region52: #{tpu_custom_call.1} parent=1 // pred_region
      %400 = dma.done [#allocation4], 16
    $region53: #{tpu_custom_call.1} parent=1 // pred_fallthru
      _
    %401 = vsyncpa [#allocation4], 1

</llo_original>
